<compile_context>
chip_gen: v6e
topology: v6e:2x2x1
jax: 0.10.0
libtpu: 0.0.40
codegen_flags: <defaults>
</compile_context>

<pallas_src>
import functools

import jax
import jax.numpy as jnp
from jax.experimental import pallas as pl
from jax.experimental.pallas import tpu as pltpu

D_IN = 21    # layer1 input width (kept natural / unpadded in HBM)
H1_PAD = 32  # layer1 output width 21 -> padded to 32 lanes (zero pad, exact)
H2_PAD = 64  # layer2 output width 42 -> padded to 64 lanes (zero pad, exact)
N_OUT = 10   # layer3 output width, stored unpadded -> no post-kernel slice


def _round_up(n: int, m: int) -> int:
    return ((n + m - 1) // m) * m


def mlp_kernel(x_ref, w1_ref, b1_ref, w2_ref, b2_ref, w3_ref, b3_ref, o_ref):
    # One batch tile: y = relu(relu(x@W1+b1)@W2+b2)@W3+b3.
    # Dot operands in the weights' dtype (bf16 default / f32 exact path);
    # f32 accumulation, f32 bias add + ReLU on the VPU.
    x = x_ref[...].astype(w1_ref.dtype)      # in-kernel cast: no extra XLA pass over x
    h1 = jnp.dot(x, w1_ref[...], preferred_element_type=jnp.float32) + b1_ref[...]
    h1 = jnp.maximum(h1, 0.0)
    h2 = (jnp.dot(h1.astype(w2_ref.dtype), w2_ref[...],
                  preferred_element_type=jnp.float32) + b2_ref[...])
    h2 = jnp.maximum(h2, 0.0)
    o_ref[...] = (jnp.dot(h2.astype(w3_ref.dtype), w3_ref[...],
                          preferred_element_type=jnp.float32)
                  + b3_ref[...]).astype(o_ref.dtype)


def prepare_params(params, compute_dtype=jnp.bfloat16):
    """One-time parameter prep (hoisted out of the forward call).

    PyTorch nn.Linear stores W as (out, in); we store W.T (in, out), zero-padded
    to the minimal aligned widths (21->32, 42->64, output kept at 10).  Biases
    are stored as (1, width) in f32.  Zero padding keeps the math exact.
    """
    (w1, b1), (w2, b2), (w3, b3) = params

    def pad_to(a, shape):
        return jnp.pad(a, [(0, s - d) for s, d in zip(shape, a.shape)])

    w1p = pad_to(w1.T.astype(compute_dtype), (D_IN, H1_PAD))     # (21, 32)
    w2p = pad_to(w2.T.astype(compute_dtype), (H1_PAD, H2_PAD))   # (32, 64)
    w3p = pad_to(w3.T.astype(compute_dtype), (H2_PAD, N_OUT))    # (64, 10)
    b1p = pad_to(b1.astype(jnp.float32)[None, :], (1, H1_PAD))
    b2p = pad_to(b2.astype(jnp.float32)[None, :], (1, H2_PAD))
    b3p = b3.astype(jnp.float32)[None, :]                        # (1, 10)
    return (w1p, b1p, w2p, b2p, w3p, b3p)


@functools.partial(jax.jit, static_argnames=("block_b",))
def mlp_forward(x, prepped, block_b: int = 2048):
    """Forward pass. `x` is (B, 21) float32; returns (B, 10) float32."""
    w1p, b1p, w2p, b2p, w3p, b3p = prepped
    B = x.shape[0]

    tb = min(block_b, _round_up(B, 8))           # batch tile (multiple of 8)
    if B > 1024 and pl.cdiv(B, tb) < 2:
        # Keep >=2 grid steps on big batches so the "parallel" axis can shard
        # across v7x's two TensorCores (single-step grids serialize onto one TC).
        tb = _round_up(pl.cdiv(B, 2), 8)
    grid_b = pl.cdiv(B, tb)                      # partial edge block is masked

    out = pl.pallas_call(
        mlp_kernel,
        out_shape=jax.ShapeDtypeStruct((B, N_OUT), jnp.float32),
        grid_spec=pl.GridSpec(
            grid=(grid_b,),
            in_specs=[
                pl.BlockSpec((tb, D_IN), lambda i: (i, 0)),        # x tile
                pl.BlockSpec((D_IN, H1_PAD), lambda i: (0, 0)),    # W1 (VMEM resident)
                pl.BlockSpec((1, H1_PAD), lambda i: (0, 0)),       # b1
                pl.BlockSpec((H1_PAD, H2_PAD), lambda i: (0, 0)),  # W2
                pl.BlockSpec((1, H2_PAD), lambda i: (0, 0)),       # b2
                pl.BlockSpec((H2_PAD, N_OUT), lambda i: (0, 0)),   # W3
                pl.BlockSpec((1, N_OUT), lambda i: (0, 0)),        # b3
            ],
            out_specs=pl.BlockSpec((tb, N_OUT), lambda i: (i, 0)),  # true width, no slice
        ),
        compiler_params=pltpu.CompilerParams(
            dimension_semantics=("parallel",)),
    )(x, w1p, b1p, w2p, b2p, w3p, b3p)

    return out


def init_linear(key, in_f, out_f):
    # Deterministic init mimicking torch.nn.Linear default (uniform +/- 1/sqrt(in))
    kw, kb = jax.random.split(key)
    bound = 1.0 / jnp.sqrt(in_f)
    w = jax.random.uniform(kw, (out_f, in_f), jnp.float32, -bound, bound)
    b = jax.random.uniform(kb, (out_f,), jnp.float32, -bound, bound)
    return w, b


def reference_forward(x, params):
    (w1, b1), (w2, b2), (w3, b3) = params
    h = jnp.maximum(x @ w1.T + b1, 0.0)
    h = jnp.maximum(h @ w2.T + b2, 0.0)
    return h @ w3.T + b3


if __name__ == "__main__":
    key = jax.random.PRNGKey(0)
    k1, k2, k3, kx, kx2 = jax.random.split(key, 5)

    # Parameters of the default forward path (layer1_ae / layer2_ae unused here).
    params = (
        init_linear(k1, 21, 21),   # layer1
        init_linear(k2, 21, 42),   # layer2
        init_linear(k3, 42, 10),   # layer3
    )

    B = 8
    x = jax.random.normal(kx, (B, 21), jnp.float32)
    ref = reference_forward(x, params)

    # f32 path: exactness check against the reference.
    prepped_f32 = prepare_params(params, jnp.float32)
    out_f32 = jax.block_until_ready(mlp_forward(x, prepped_f32))
    assert out_f32.shape == (B, N_OUT)
    assert jnp.allclose(out_f32, ref, atol=1e-5, rtol=1e-5)

    # Default bf16-operand path (v5e/v6e/v7x bandwidth + MXU), f32 accumulation.
    prepped_bf16 = prepare_params(params)
    out_bf16 = jax.block_until_ready(mlp_forward(x, prepped_bf16))
    assert out_bf16.shape == (B, N_OUT)
    assert jnp.allclose(out_bf16, ref, atol=1e-1, rtol=1e-1)

    # Batch not a multiple of the tile: exercises the cdiv grid / masked edge block.
    B2 = 10
    x2 = jax.random.normal(kx2, (B2, 21), jnp.float32)
    ref2 = reference_forward(x2, params)
    out2 = jax.block_until_ready(mlp_forward(x2, prepped_f32))
    assert out2.shape == (B2, N_OUT)
    assert jnp.allclose(out2, ref2, atol=1e-5, rtol=1e-5)

    print("KERNEL_OK")
</pallas_src>

<mosaic_0001>
module attributes {stable_mosaic.version = 11 : i64} {
  func.func @mlp_kernel(%arg0: i32, %arg1: memref<8x21xf32, #tpu.memory_space<vmem>>, %arg2: memref<21x32xf32, #tpu.memory_space<vmem>>, %arg3: memref<1x32xf32, #tpu.memory_space<vmem>>, %arg4: memref<32x64xf32, #tpu.memory_space<vmem>>, %arg5: memref<1x64xf32, #tpu.memory_space<vmem>>, %arg6: memref<64x10xf32, #tpu.memory_space<vmem>>, %arg7: memref<1x10xf32, #tpu.memory_space<vmem>>, %arg8: memref<8x10xf32, #tpu.memory_space<vmem>>) attributes {dimension_semantics = [#tpu.dimension_semantics<parallel>], iteration_bounds = array<i64: 1>, scalar_prefetch = 0 : i64, scratch_operands = 0 : i64, tpu.core_type = #tpu.core_type<tc>, window_params = [{transform_indices = @transform_0, window_bounds = array<i64: 8, 21>}, {pipeline_mode = #tpu.pipeline_mode<synchronous>, transform_indices = @transform_1, window_bounds = array<i64: 21, 32>}, {pipeline_mode = #tpu.pipeline_mode<synchronous>, transform_indices = @transform_2, window_bounds = array<i64: 1, 32>}, {pipeline_mode = #tpu.pipeline_mode<synchronous>, transform_indices = @transform_3, window_bounds = array<i64: 32, 64>}, {pipeline_mode = #tpu.pipeline_mode<synchronous>, transform_indices = @transform_4, window_bounds = array<i64: 1, 64>}, {pipeline_mode = #tpu.pipeline_mode<synchronous>, transform_indices = @transform_5, window_bounds = array<i64: 64, 10>}, {pipeline_mode = #tpu.pipeline_mode<synchronous>, transform_indices = @transform_6, window_bounds = array<i64: 1, 10>}, {transform_indices = @transform_7, window_bounds = array<i64: 8, 10>}]} {
    %c0 = arith.constant 0 : index
    %c0_0 = arith.constant 0 : index
    %0 = vector.load %arg1[%c0, %c0_0] : memref<8x21xf32, #tpu.memory_space<vmem>>, vector<8x21xf32>
    %c0_1 = arith.constant 0 : index
    %c0_2 = arith.constant 0 : index
    %1 = vector.load %arg2[%c0_1, %c0_2] : memref<21x32xf32, #tpu.memory_space<vmem>>, vector<21x32xf32>
    %cst = arith.constant dense<0.000000e+00> : vector<8x32xf32>
    %2 = tpu.matmul %0, %1, %cst {dimension_numbers = #tpu.dot_dimension_numbers<[1], [0], [0], [1], [0, 0, 1, 1], [], []>} : vector<8x21xf32>, vector<21x32xf32>, vector<8x32xf32> -> vector<8x32xf32>
    %c0_3 = arith.constant 0 : index
    %c0_4 = arith.constant 0 : index
    %3 = vector.load %arg3[%c0_3, %c0_4] : memref<1x32xf32, #tpu.memory_space<vmem>>, vector<1x32xf32>
    %4 = vector.broadcast %3 : vector<1x32xf32> to vector<8x32xf32>
    %5 = arith.addf %2, %4 : vector<8x32xf32>
    %cst_5 = arith.constant 0.000000e+00 : f32
    %6 = vector.broadcast %cst_5 : f32 to vector<8x32xf32>
    %7 = arith.maximumf %5, %6 : vector<8x32xf32>
    %c0_6 = arith.constant 0 : index
    %c0_7 = arith.constant 0 : index
    %8 = vector.load %arg4[%c0_6, %c0_7] : memref<32x64xf32, #tpu.memory_space<vmem>>, vector<32x64xf32>
    %cst_8 = arith.constant dense<0.000000e+00> : vector<8x64xf32>
    %9 = tpu.matmul %7, %8, %cst_8 {dimension_numbers = #tpu.dot_dimension_numbers<[1], [0], [0], [1], [0, 0, 1, 1], [], []>} : vector<8x32xf32>, vector<32x64xf32>, vector<8x64xf32> -> vector<8x64xf32>
    %c0_9 = arith.constant 0 : index
    %c0_10 = arith.constant 0 : index
    %10 = vector.load %arg5[%c0_9, %c0_10] : memref<1x64xf32, #tpu.memory_space<vmem>>, vector<1x64xf32>
    %11 = vector.broadcast %10 : vector<1x64xf32> to vector<8x64xf32>
    %12 = arith.addf %9, %11 : vector<8x64xf32>
    %cst_11 = arith.constant 0.000000e+00 : f32
    %13 = vector.broadcast %cst_11 : f32 to vector<8x64xf32>
    %14 = arith.maximumf %12, %13 : vector<8x64xf32>
    %c0_12 = arith.constant 0 : index
    %c0_13 = arith.constant 0 : index
    %15 = vector.load %arg6[%c0_12, %c0_13] : memref<64x10xf32, #tpu.memory_space<vmem>>, vector<64x10xf32>
    %cst_14 = arith.constant dense<0.000000e+00> : vector<8x10xf32>
    %16 = tpu.matmul %14, %15, %cst_14 {dimension_numbers = #tpu.dot_dimension_numbers<[1], [0], [0], [1], [0, 0, 1, 1], [], []>} : vector<8x64xf32>, vector<64x10xf32>, vector<8x10xf32> -> vector<8x10xf32>
    %c0_15 = arith.constant 0 : index
    %c0_16 = arith.constant 0 : index
    %17 = vector.load %arg7[%c0_15, %c0_16] : memref<1x10xf32, #tpu.memory_space<vmem>>, vector<1x10xf32>
    %18 = vector.broadcast %17 : vector<1x10xf32> to vector<8x10xf32>
    %19 = arith.addf %16, %18 : vector<8x10xf32>
    %c0_17 = arith.constant 0 : index
    %c0_18 = arith.constant 0 : index
    %20 = vector.load %arg8[%c0_17, %c0_18] : memref<8x10xf32, #tpu.memory_space<vmem>>, vector<8x10xf32>
    tpu.vector_store %arg8[%c0_17, %c0_18], %19 {strides = array<i32>} : memref<8x10xf32, #tpu.memory_space<vmem>>, vector<8x10xf32>,
    return
  }
  func.func @transform_0(%arg0: i32) -> (i32, i32) {
    %c0_i32 = arith.constant 0 : i32
    %c0_i32_0 = arith.constant 0 : i32
    return %arg0, %c0_i32 : i32, i32
  }
  func.func @transform_1(%arg0: i32) -> (i32, i32) {
    %c0_i32 = arith.constant 0 : i32
    %c0_i32_0 = arith.constant 0 : i32
    %c0_i32_1 = arith.constant 0 : i32
    return %c0_i32, %c0_i32_0 : i32, i32
  }
  func.func @transform_2(%arg0: i32) -> (i32, i32) {
    %c0_i32 = arith.constant 0 : i32
    %c0_i32_0 = arith.constant 0 : i32
    %c0_i32_1 = arith.constant 0 : i32
    return %c0_i32, %c0_i32_0 : i32, i32
  }
  func.func @transform_3(%arg0: i32) -> (i32, i32) {
    %c0_i32 = arith.constant 0 : i32
    %c0_i32_0 = arith.constant 0 : i32
    %c0_i32_1 = arith.constant 0 : i32
    return %c0_i32, %c0_i32_0 : i32, i32
  }
  func.func @transform_4(%arg0: i32) -> (i32, i32) {
    %c0_i32 = arith.constant 0 : i32
    %c0_i32_0 = arith.constant 0 : i32
    %c0_i32_1 = arith.constant 0 : i32
    return %c0_i32, %c0_i32_0 : i32, i32
  }
  func.func @transform_5(%arg0: i32) -> (i32, i32) {
    %c0_i32 = arith.constant 0 : i32
    %c0_i32_0 = arith.constant 0 : i32
    %c0_i32_1 = arith.constant 0 : i32
    return %c0_i32, %c0_i32_0 : i32, i32
  }
  func.func @transform_6(%arg0: i32) -> (i32, i32) {
    %c0_i32 = arith.constant 0 : i32
    %c0_i32_0 = arith.constant 0 : i32
    %c0_i32_1 = arith.constant 0 : i32
    return %c0_i32, %c0_i32_0 : i32, i32
  }
  func.func @transform_7(%arg0: i32) -> (i32, i32) {
    %c0_i32 = arith.constant 0 : i32
    %c0_i32_0 = arith.constant 0 : i32
    return %arg0, %c0_i32 : i32, i32
  }
}

</mosaic_0001>

<llo_original>
// kernel: mlp_forward.1
$region0: #{mlp_forward.1}
  #allocation0 [shape = 'u32[]', space=smem, size = 0x4, offset = 0x4, fixed_abs, tag = 'smem constant byte address 0x4 - core index']
  #allocation1 [shape = 'u32[144,128]{1,0:T(1,128)}', space=vmem, size = 0x12000, scoped, tag = 'internal scratch']
  %s0 = inlined_call_operand.vmem [shape: f32[8,21], index: 0, kind: input, shape index: {}]
  %s1 = inlined_call_operand.vmem [shape: f32[21,32], index: 1, kind: input, shape index: {}]
  %s2 = inlined_call_operand.vmem [shape: f32[1,32], index: 2, kind: input, shape index: {}]
  %s3 = inlined_call_operand.vmem [shape: f32[32,64], index: 3, kind: input, shape index: {}]
  %s4 = inlined_call_operand.vmem [shape: f32[1,64], index: 4, kind: input, shape index: {}]
  %s5 = inlined_call_operand.vmem [shape: f32[64,10], index: 5, kind: input, shape index: {}]
  %s6 = inlined_call_operand.vmem [shape: f32[1,10], index: 6, kind: input, shape index: {}]
  %s7 = inlined_call_operand.hbm [shape: f32[8,10], index: 7, kind: output, shape index: {}]
  %s8 = sld [smem:[#allocation0]]
  $region38: #{mlp_forward.1} parent=0
    _
  %s10 = ssub.s32 1, %s8
  %s11 = scalar_select 0, %s10, %s8
  $region1: #{mlp_forward.1} parent=0
    #allocation2 [shape = 'u8[4096]{0}', space=vmem, size = 0x1000, scoped, tag = 'output window, operand 0, single buffered']
    #allocation3 [shape = 's32[1]{0}', space=sflag, size = 0x4, scoped, tag = 'scoped memory for mlp_forward.1']
    %12 = vsyncpa [#allocation3], 0
    // Predicated region
    $region2: #{mlp_forward.1} parent=1 // pred_check
      _
    $region3: #{mlp_forward.1} parent=1 // pred_check_branch
      %14 = sbr.rel (0) target = $region5
    $region4: #{mlp_forward.1} parent=1 // pred_region
      _
    $region5: #{mlp_forward.1} parent=1 // pred_fallthru
      _
    // Predicated region
    $region6: #{mlp_forward.1} parent=1 // pred_check
      _
    $region7: #{mlp_forward.1} parent=1 // pred_check_branch
      %16 = sbr.rel (0) target = $region9
    $region8: #{mlp_forward.1} parent=1 // pred_region
      _
    $region9: #{mlp_forward.1} parent=1 // pred_fallthru
      _
    // Predicated region
    $region10: #{mlp_forward.1} parent=1 // pred_check
      _
    $region11: #{mlp_forward.1} parent=1 // pred_check_branch
      %18 = sbr.rel (0) target = $region13
    $region12: #{mlp_forward.1} parent=1 // pred_region
      _
    $region13: #{mlp_forward.1} parent=1 // pred_fallthru
      _
    // Predicated region
    $region14: #{mlp_forward.1} parent=1 // pred_check
      _
    $region15: #{mlp_forward.1} parent=1 // pred_check_branch
      %20 = sbr.rel (0) target = $region17
    $region16: #{mlp_forward.1} parent=1 // pred_region
      _
    $region17: #{mlp_forward.1} parent=1 // pred_fallthru
      _
    // Predicated region
    $region18: #{mlp_forward.1} parent=1 // pred_check
      _
    $region19: #{mlp_forward.1} parent=1 // pred_check_branch
      %22 = sbr.rel (0) target = $region21
    $region20: #{mlp_forward.1} parent=1 // pred_region
      _
    $region21: #{mlp_forward.1} parent=1 // pred_fallthru
      _
    // Predicated region
    $region22: #{mlp_forward.1} parent=1 // pred_check
      _
    $region23: #{mlp_forward.1} parent=1 // pred_check_branch
      %24 = sbr.rel (0) target = $region25
    $region24: #{mlp_forward.1} parent=1 // pred_region
      _
    $region25: #{mlp_forward.1} parent=1 // pred_fallthru
      _
    // Predicated region
    $region26: #{mlp_forward.1} parent=1 // pred_check
      _
    $region27: #{mlp_forward.1} parent=1 // pred_check_branch
      %26 = sbr.rel (0) target = $region29
    $region28: #{mlp_forward.1} parent=1 // pred_region
      _
    $region29: #{mlp_forward.1} parent=1 // pred_fallthru
      _
    %v27 = vld [vmem:[%s0] sm:$0xff]
    %v28 = vld [vmem:[%s1] sm:$0xff]
    %v29 = vld [vmem:[%s1 + $0x8] sm:$0xff]
    %v30 = vld [vmem:[%s1 + $0x10] sm:$0x1f]
    %v31 = vld [vmem:[%s2] sm:$0x1]
    %v33 = vlaneseq
    %v34 = vshrl.u32 %v33, 7
    %v35 = vsub.s32 0, %v34
    %v36 = vrot.slane %v31, %v35
    %vm38 = vcmask 171008
    %v40 = vsel %vm38, %v27, 0
    %vm42 = vcmask 1044480
    %v44 = vsel %vm42, %v30, 0
    %46 = vmatprep.subr.mxu0 0.0
    %47 = vmatpush1.msra.mxu0 0.0
    %48 = vmatprep.subr.mxu0 0.0
    %49 = vmatpush1.msra.mxu0 0.0
    %50 = vmatprep.subr.mxu0 0.0
    %51 = vmatpush1.msra.mxu0 0.0
    %52 = vmatprep.subr.mxu0 0.0
    %53 = vmatpush1.msra.mxu0 0.0
    %54 = vmatprep.subr.mxu0 0.0
    %55 = vmatpush1.msra.mxu0 0.0
    %56 = vmatprep.subr.mxu0 0.0
    %57 = vmatpush1.msra.mxu0 0.0
    %58 = vmatprep.subr.mxu0 0.0
    %59 = vmatpush1.msra.mxu0 0.0
    %60 = vmatprep.subr.mxu0 0.0
    %61 = vmatpush1.msra.mxu0 0.0
    %62 = vmatprep.subr.mxu0 0.0
    %63 = vmatpush1.msra.mxu0 0.0
    %64 = vmatprep.subr.mxu0 0.0
    %65 = vmatpush1.msra.mxu0 0.0
    %66 = vmatprep.subr.mxu0 0.0
    %67 = vmatpush1.msra.mxu0 0.0
    %68 = vmatprep.subr.mxu0 0.0
    %69 = vmatpush1.msra.mxu0 0.0
    %70 = vmatprep.subr.mxu0 0.0
    %71 = vmatpush1.msra.mxu0 0.0
    %72 = vmatprep.subr.mxu0 0.0
    %73 = vmatpush1.msra.mxu0 %v44
    %74 = vmatprep.subr.mxu0 0.0
    %75 = vmatpush1.msra.mxu0 %v29
    %76 = vmatprep.subr.mxu0 0.0
    %77 = vmatpush1.msra.mxu0 %v28
    %78 = vmatprep.subr.mxu0 0.0
    %79 = vmatpush2.msra.mxu0 0.0
    %80 = vmatprep.subr.mxu0 0.0
    %81 = vmatpush2.msra.mxu0 0.0
    %82 = vmatprep.subr.mxu0 0.0
    %83 = vmatpush2.msra.mxu0 0.0
    %84 = vmatprep.subr.mxu0 0.0
    %85 = vmatpush2.msra.mxu0 0.0
    %86 = vmatprep.subr.mxu0 0.0
    %87 = vmatpush2.msra.mxu0 0.0
    %88 = vmatprep.subr.mxu0 0.0
    %89 = vmatpush2.msra.mxu0 0.0
    %90 = vmatprep.subr.mxu0 0.0
    %91 = vmatpush2.msra.mxu0 0.0
    %92 = vmatprep.subr.mxu0 0.0
    %93 = vmatpush2.msra.mxu0 0.0
    %94 = vmatprep.subr.mxu0 0.0
    %95 = vmatpush2.msra.mxu0 0.0
    %96 = vmatprep.subr.mxu0 0.0
    %97 = vmatpush2.msra.mxu0 0.0
    %98 = vmatprep.subr.mxu0 0.0
    %99 = vmatpush2.msra.mxu0 0.0
    %100 = vmatprep.subr.mxu0 0.0
    %101 = vmatpush2.msra.mxu0 0.0
    %102 = vmatprep.subr.mxu0 0.0
    %103 = vmatpush2.msra.mxu0 0.0
    %104 = vmatprep.subr.mxu0 0.0
    %105 = vmatpush2.msra.mxu0 0.0
    %106 = vmatprep.subr.mxu0 0.0
    %107 = vmatpush2.msra.mxu0 0.0
    %108 = vmatprep.subr.mxu0 0.0
    %109 = vmatpush2.msra.mxu0 0.0
    %110 = vmatprep.mubr.f32.mxu0 0.0
    %111 = vmatmul.mubr.f32.gmra.mxu0 %v40
    %v112 = vpop.f32.mrf.mxu0
    %v113 = vadd.f32 %v36, %v112
    %v114 = vpop.f32.mrf.mxu0
    %115 = vdwg.mxu0
    %v116 = vmax.f32 %v113, 0.0
    %v117 = vld [vmem:[%s3] sm:$0xff]
    %v118 = vld [vmem:[%s3 + $0x8] sm:$0xff]
    %v119 = vld [vmem:[%s3 + $0x10] sm:$0xff]
    %v120 = vld [vmem:[%s3 + $0x18] sm:$0xff]
    %v121 = vld [vmem:[%s4] sm:$0x1]
    %v123 = vlaneseq
    %v124 = vshrl.u32 %v123, 7
    %v125 = vsub.s32 0, %v124
    %v126 = vrot.slane %v121, %v125
    %vm128 = vcmask 261120
    %v130 = vsel %vm128, %v116, 0
    %132 = vmatprep.subr.mxu0 0.0
    %133 = vmatpush1.msra.mxu0 0.0
    %134 = vmatprep.subr.mxu0 0.0
    %135 = vmatpush1.msra.mxu0 0.0
    %136 = vmatprep.subr.mxu0 0.0
    %137 = vmatpush1.msra.mxu0 0.0
    %138 = vmatprep.subr.mxu0 0.0
    %139 = vmatpush1.msra.mxu0 0.0
    %140 = vmatprep.subr.mxu0 0.0
    %141 = vmatpush1.msra.mxu0 0.0
    %142 = vmatprep.subr.mxu0 0.0
    %143 = vmatpush1.msra.mxu0 0.0
    %144 = vmatprep.subr.mxu0 0.0
    %145 = vmatpush1.msra.mxu0 0.0
    %146 = vmatprep.subr.mxu0 0.0
    %147 = vmatpush1.msra.mxu0 0.0
    %148 = vmatprep.subr.mxu0 0.0
    %149 = vmatpush1.msra.mxu0 0.0
    %150 = vmatprep.subr.mxu0 0.0
    %151 = vmatpush1.msra.mxu0 0.0
    %152 = vmatprep.subr.mxu0 0.0
    %153 = vmatpush1.msra.mxu0 0.0
    %154 = vmatprep.subr.mxu0 0.0
    %155 = vmatpush1.msra.mxu0 0.0
    %156 = vmatprep.subr.mxu0 0.0
    %157 = vmatpush1.msra.mxu0 %v120
    %158 = vmatprep.subr.mxu0 0.0
    %159 = vmatpush1.msra.mxu0 %v119
    %160 = vmatprep.subr.mxu0 0.0
    %161 = vmatpush1.msra.mxu0 %v118
    %162 = vmatprep.subr.mxu0 0.0
    %163 = vmatpush1.msra.mxu0 %v117
    %164 = vmatprep.subr.mxu0 0.0
    %165 = vmatpush2.msra.mxu0 0.0
    %166 = vmatprep.subr.mxu0 0.0
    %167 = vmatpush2.msra.mxu0 0.0
    %168 = vmatprep.subr.mxu0 0.0
    %169 = vmatpush2.msra.mxu0 0.0
    %170 = vmatprep.subr.mxu0 0.0
    %171 = vmatpush2.msra.mxu0 0.0
    %172 = vmatprep.subr.mxu0 0.0
    %173 = vmatpush2.msra.mxu0 0.0
    %174 = vmatprep.subr.mxu0 0.0
    %175 = vmatpush2.msra.mxu0 0.0
    %176 = vmatprep.subr.mxu0 0.0
    %177 = vmatpush2.msra.mxu0 0.0
    %178 = vmatprep.subr.mxu0 0.0
    %179 = vmatpush2.msra.mxu0 0.0
    %180 = vmatprep.subr.mxu0 0.0
    %181 = vmatpush2.msra.mxu0 0.0
    %182 = vmatprep.subr.mxu0 0.0
    %183 = vmatpush2.msra.mxu0 0.0
    %184 = vmatprep.subr.mxu0 0.0
    %185 = vmatpush2.msra.mxu0 0.0
    %186 = vmatprep.subr.mxu0 0.0
    %187 = vmatpush2.msra.mxu0 0.0
    %188 = vmatprep.subr.mxu0 0.0
    %189 = vmatpush2.msra.mxu0 0.0
    %190 = vmatprep.subr.mxu0 0.0
    %191 = vmatpush2.msra.mxu0 0.0
    %192 = vmatprep.subr.mxu0 0.0
    %193 = vmatpush2.msra.mxu0 0.0
    %194 = vmatprep.subr.mxu0 0.0
    %195 = vmatpush2.msra.mxu0 0.0
    %196 = vmatprep.mubr.f32.mxu0 0.0
    %197 = vmatmul.mubr.f32.gmra.mxu0 %v130
    %v198 = vpop.f32.mrf.mxu0
    %v199 = vadd.f32 %v126, %v198
    %v200 = vpop.f32.mrf.mxu0
    %201 = vdwg.mxu0
    %v202 = vmax.f32 %v199, 0.0
    %v203 = vld [vmem:[%s5] sm:$0xff]
    %v204 = vld [vmem:[%s5 + $0x8] sm:$0xff]
    %v205 = vld [vmem:[%s5 + $0x10] sm:$0xff]
    %v206 = vld [vmem:[%s5 + $0x18] sm:$0xff]
    %v207 = vld [vmem:[%s5 + $0x20] sm:$0xff]
    %v208 = vld [vmem:[%s5 + $0x28] sm:$0xff]
    %v209 = vld [vmem:[%s5 + $0x30] sm:$0xff]
    %v210 = vld [vmem:[%s5 + $0x38] sm:$0xff]
    %v211 = vld [vmem:[%s6] sm:$0x1]
    %v213 = vlaneseq
    %v214 = vshrl.u32 %v213, 7
    %v215 = vsub.s32 0, %v214
    %v216 = vrot.slane %v211, %v215
    %vm218 = vcmask 523264
    %v220 = vsel %vm218, %v202, 0
    %222 = vmatprep.subr.mxu0 0.0
    %223 = vmatpush1.msra.mxu0 0.0
    %224 = vmatprep.subr.mxu0 0.0
    %225 = vmatpush1.msra.mxu0 0.0
    %226 = vmatprep.subr.mxu0 0.0
    %227 = vmatpush1.msra.mxu0 0.0
    %228 = vmatprep.subr.mxu0 0.0
    %229 = vmatpush1.msra.mxu0 0.0
    %230 = vmatprep.subr.mxu0 0.0
    %231 = vmatpush1.msra.mxu0 0.0
    %232 = vmatprep.subr.mxu0 0.0
    %233 = vmatpush1.msra.mxu0 0.0
    %234 = vmatprep.subr.mxu0 0.0
    %235 = vmatpush1.msra.mxu0 0.0
    %236 = vmatprep.subr.mxu0 0.0
    %237 = vmatpush1.msra.mxu0 0.0
    %238 = vmatprep.subr.mxu0 0.0
    %239 = vmatpush1.msra.mxu0 %v210
    %240 = vmatprep.subr.mxu0 0.0
    %241 = vmatpush1.msra.mxu0 %v209
    %242 = vmatprep.subr.mxu0 0.0
    %243 = vmatpush1.msra.mxu0 %v208
    %244 = vmatprep.subr.mxu0 0.0
    %245 = vmatpush1.msra.mxu0 %v207
    %246 = vmatprep.subr.mxu0 0.0
    %247 = vmatpush1.msra.mxu0 %v206
    %248 = vmatprep.subr.mxu0 0.0
    %249 = vmatpush1.msra.mxu0 %v205
    %250 = vmatprep.subr.mxu0 0.0
    %251 = vmatpush1.msra.mxu0 %v204
    %252 = vmatprep.subr.mxu0 0.0
    %253 = vmatpush1.msra.mxu0 %v203
    %254 = vmatprep.subr.mxu0 0.0
    %255 = vmatpush2.msra.mxu0 0.0
    %256 = vmatprep.subr.mxu0 0.0
    %257 = vmatpush2.msra.mxu0 0.0
    %258 = vmatprep.subr.mxu0 0.0
    %259 = vmatpush2.msra.mxu0 0.0
    %260 = vmatprep.subr.mxu0 0.0
    %261 = vmatpush2.msra.mxu0 0.0
    %262 = vmatprep.subr.mxu0 0.0
    %263 = vmatpush2.msra.mxu0 0.0
    %264 = vmatprep.subr.mxu0 0.0
    %265 = vmatpush2.msra.mxu0 0.0
    %266 = vmatprep.subr.mxu0 0.0
    %267 = vmatpush2.msra.mxu0 0.0
    %268 = vmatprep.subr.mxu0 0.0
    %269 = vmatpush2.msra.mxu0 0.0
    %270 = vmatprep.subr.mxu0 0.0
    %271 = vmatpush2.msra.mxu0 0.0
    %272 = vmatprep.subr.mxu0 0.0
    %273 = vmatpush2.msra.mxu0 0.0
    %274 = vmatprep.subr.mxu0 0.0
    %275 = vmatpush2.msra.mxu0 0.0
    %276 = vmatprep.subr.mxu0 0.0
    %277 = vmatpush2.msra.mxu0 0.0
    %278 = vmatprep.subr.mxu0 0.0
    %279 = vmatpush2.msra.mxu0 0.0
    %280 = vmatprep.subr.mxu0 0.0
    %281 = vmatpush2.msra.mxu0 0.0
    %282 = vmatprep.subr.mxu0 0.0
    %283 = vmatpush2.msra.mxu0 0.0
    %284 = vmatprep.subr.mxu0 0.0
    %285 = vmatpush2.msra.mxu0 0.0
    %286 = vmatprep.mubr.f32.mxu0 0.0
    %287 = vmatmul.mubr.f32.gmra.mxu0 %v220
    %v288 = vpop.f32.mrf.mxu0
    %v289 = vadd.f32 %v216, %v288
    %v290 = vpop.f32.mrf.mxu0
    %291 = vdwg.mxu0
    %vm292 = vcmask 80896
    %293 = vst.msk [vmem:[#allocation2] sm:$0xff] %vm292, %v289
    // Predicated region
    $region30: #{mlp_forward.1} parent=1 // pred_check
      _
    $region31: #{mlp_forward.1} parent=1 // pred_check_branch
      %295 = sbr.rel (0) target = $region33
    $region32: #{mlp_forward.1} parent=1 // pred_region
      %s297 = ssub.s32 128, 128
      %298 = vsyncadd [#allocation3], %s297
      %s300 = sshll.u32 [#allocation2], 4
      %s301 = int_to_ptr.vmem [resolvable:$true] %s300
      %303 = dma.vmem_to_hbm [thread:$0]  %s301, 128, %s7, [#allocation3]
    $region33: #{mlp_forward.1} parent=1 // pred_fallthru
      _
    // Predicated region
    $region34: #{mlp_forward.1} parent=1 // pred_check
      _
    $region35: #{mlp_forward.1} parent=1 // pred_check_branch
      %305 = sbr.rel (0) target = $region37
    $region36: #{mlp_forward.1} parent=1 // pred_region
      %306 = dma.done [#allocation3], 128
    $region37: #{mlp_forward.1} parent=1 // pred_fallthru
      _
    %307 = vsyncpa [#allocation3], 1

</llo_original>
